<compile_context>
chip_gen: v6e
topology: v6e:2x2x1
jax: 0.10.0
libtpu: 0.0.40
codegen_flags: <defaults>
</compile_context>

<pallas_src>
import jax
import jax.numpy as jnp
from jax.experimental import pallas as pl
from jax.experimental.pallas import tpu as pltpu

_BIG_NEG = 1.0e30  # "minus infinity" fill for masked-out points (finite: no inf/nan)


def _round_up(v, m):
    return (v + m - 1) // m * m


def _pfn_kernel(x_ref, mask_ref, wt_ref, sum_ref, sq_ref, ext_ref):
    """Fused: y_s = x @ (W.T * sign(gamma)); accumulate per-channel sum / sumsq
    of y_s; emit per-pillar masked max of y_s."""

    # Zero the per-core-row stat accumulators at the start of the arbitrary axis.
    @pl.when(pl.program_id(1) == 0)
    def _():
        sum_ref[...] = jnp.zeros_like(sum_ref)
        sq_ref[...] = jnp.zeros_like(sq_ref)

    tb, n_pad = mask_ref.shape
    cout = ext_ref.shape[-1]

    x = x_ref[...].astype(jnp.float32)                        # (tb*N_pad, Cin)
    y = jnp.dot(x, wt_ref[...],
                preferred_element_type=jnp.float32)           # (tb*N_pad, Cout)

    # Global (pre-mask) batch statistics of the linear output.  Padded rows are
    # all-zero so they contribute exactly 0 to both accumulators.
    sum_ref[...] += jnp.sum(y, axis=0, keepdims=True).reshape(1, 1, cout)
    sq_ref[...] += jnp.sum(y * y, axis=0, keepdims=True).reshape(1, 1, cout)

    # Per-pillar masked max.  N_pad % 8 == 0 -> the reshape is a sublane split.
    m3 = mask_ref[...].reshape(tb, n_pad, 1)                  # f32, small relayout
    v3 = (m3 > 0.0).astype(jnp.float32)                       # 1.0 valid / 0.0 invalid
    y3 = y.reshape(tb, n_pad, cout) + (v3 - 1.0) * jnp.float32(_BIG_NEG)
    ext_ref[...] = jnp.max(y3, axis=1)                        # (tb, Cout)


def pfn_layer(x, mask, weight, gamma, beta, *, eps=1e-5, block_b=512):
    """x: (B, N, Cin), mask: (B, N) 0/1, weight: (Cout, Cin), gamma/beta: (Cout,).
    Returns (B, Cout), matching PFNLayer.forward (training-mode BN statistics)."""
    B, N, Cin = x.shape
    Cout = weight.shape[0]
    out_dtype = x.dtype

    # ---- tiling: flatten points, pad N to a sublane multiple, cap VMEM ------
    n_pad = _round_up(N, 8)
    max_rows = 4096                                   # x tile (rows x 128 lanes) ~2 MiB
    tb = min(block_b, max(1, max_rows // n_pad))      # pillars per tile
    tb = max(8, _round_up(min(tb, B), 8))
    nb2 = (B + 2 * tb - 1) // (2 * tb)                # tiles per core row
    b_pad = 2 * nb2 * tb

    xf = x.astype(jnp.float32)
    mf = mask.astype(jnp.float32)
    if b_pad != B or n_pad != N:
        # Zero padding: padded points/pillars contribute 0 to the statistics
        # and have mask == 0, so they never win the masked max.
        xf = jnp.pad(xf, ((0, b_pad - B), (0, n_pad - N), (0, 0)))
        mf = jnp.pad(mf, ((0, b_pad - B), (0, n_pad - N)))
    x2d = xf.reshape(b_pad * n_pad, Cin)              # free metadata reshape

    g = gamma.astype(jnp.float32)
    sign = jnp.where(g >= 0.0, 1.0, -1.0)             # (Cout,)
    wt_s = weight.astype(jnp.float32).T * sign[None, :]   # (Cin, Cout), sign-folded

    ssum, ssq, ext = pl.pallas_call(
        _pfn_kernel,
        out_shape=(
            jax.ShapeDtypeStruct((2, 1, Cout), jnp.float32),   # per-core-row sum(y_s)
            jax.ShapeDtypeStruct((2, 1, Cout), jnp.float32),   # per-core-row sum(y_s^2)
            jax.ShapeDtypeStruct((b_pad, Cout), jnp.float32),  # per-pillar masked max(y_s)
        ),
        grid_spec=pltpu.PrefetchScalarGridSpec(
            num_scalar_prefetch=0,
            grid=(2, nb2),                              # (core row, pillar tile)
            in_specs=[
                pl.BlockSpec((tb * n_pad, Cin), lambda c, i: (c * nb2 + i, 0)),
                pl.BlockSpec((tb, n_pad), lambda c, i: (c * nb2 + i, 0)),
                pl.BlockSpec((Cin, Cout), lambda c, i: (0, 0)),
            ],
            out_specs=[
                pl.BlockSpec((1, 1, Cout), lambda c, i: (c, 0, 0)),
                pl.BlockSpec((1, 1, Cout), lambda c, i: (c, 0, 0)),
                pl.BlockSpec((tb, Cout), lambda c, i: (c * nb2 + i, 0)),
            ],
        ),
        compiler_params=pltpu.CompilerParams(
            dimension_semantics=("parallel", "arbitrary"),
            vmem_limit_bytes=32 * 1024 * 1024,
        ),
    )(x2d, mf, wt_s)

    # ---- tiny (Cout)- and (B, Cout)-sized epilogue in plain XLA -------------
    count = jnp.float32(B * N)                          # true, unpadded count
    sum_s = jnp.sum(ssum[:, 0, :], axis=0)              # (Cout,)  sum of sign*y
    sq_s = jnp.sum(ssq[:, 0, :], axis=0)                # (Cout,)  sum of y^2
    mean_s = sum_s / count                               # mean of sign*y
    var = jnp.maximum(sq_s / count - mean_s * mean_s, 0.0)   # biased variance of y
    inv = jax.lax.rsqrt(var + jnp.float32(eps))
    a = jnp.abs(g) * inv                                 # (Cout,)  >= 0

    e = ext[:B]                                          # (B, Cout) extremal sign*y
    has = jnp.any(mask > 0, axis=1)                      # (B,) pillar has a valid point
    out = jnp.maximum(a[None, :] * (e - mean_s[None, :]) + beta.astype(jnp.float32)[None, :],
                      0.0)
    out = jnp.where(has[:, None], out, 0.0)
    return out.astype(out_dtype)


def _reference(x, mask, weight, gamma, beta, eps=1e-5):
    y = jnp.einsum("bni,oi->bno", x, weight)            # Linear (no bias)
    mean = y.mean(axis=(0, 1))
    var = y.var(axis=(0, 1))                            # biased, as in BN training
    y = (y - mean) / jnp.sqrt(var + eps) * gamma + beta
    y = jnp.maximum(y, 0.0)
    y = y * mask[..., None]
    return y.max(axis=1)


if __name__ == "__main__":
    key = jax.random.PRNGKey(0)
    k_x, k_m, k_w, k_g, k_b = jax.random.split(key, 5)

    # Small but edge-case-rich shapes: N not a multiple of 8 (point padding),
    # B forces pillar padding and >1 tile per core row, gamma has mixed signs,
    # and one pillar is completely empty.
    B, N, Cin, Cout = 24, 20, 4, 32

    x = jax.random.normal(k_x, (B, N, Cin), dtype=jnp.float32)
    mask = (jax.random.uniform(k_m, (B, N)) < 0.8).astype(jnp.float32)
    mask = mask.at[0].set(0.0)                           # entirely-empty pillar
    weight = jax.random.normal(k_w, (Cout, Cin), dtype=jnp.float32) * 0.1
    gamma = jax.random.normal(k_g, (Cout,), dtype=jnp.float32)   # mixed signs
    beta = jax.random.normal(k_b, (Cout,), dtype=jnp.float32) * 0.1

    out = pfn_layer(x, mask, weight, gamma, beta, eps=1e-5, block_b=8)
    out = jax.block_until_ready(out)

    ref = _reference(x, mask, weight, gamma, beta, eps=1e-5)
    assert out.shape == (B, Cout)
    err = float(jnp.max(jnp.abs(out - ref)))
    assert jnp.allclose(out, ref, rtol=2e-4, atol=2e-4), f"mismatch vs reference, max abs err={err}"

    print("KERNEL_OK")
</pallas_src>

<mosaic_0001>
module attributes {stable_mosaic.version = 11 : i64} {
  func.func @_pfn_kernel(%arg0: i32, %arg1: i32, %arg2: memref<192x4xf32, #tpu.memory_space<vmem>>, %arg3: memref<8x24xf32, #tpu.memory_space<vmem>>, %arg4: memref<4x32xf32, #tpu.memory_space<vmem>>, %arg5: memref<1x1x32xf32, #tpu.memory_space<vmem>>, %arg6: memref<1x1x32xf32, #tpu.memory_space<vmem>>, %arg7: memref<8x32xf32, #tpu.memory_space<vmem>>) attributes {dimension_semantics = [#tpu.dimension_semantics<parallel>, #tpu.dimension_semantics<arbitrary>], iteration_bounds = array<i64: 2, 2>, scalar_prefetch = 0 : i64, scratch_operands = 0 : i64, tpu.core_type = #tpu.core_type<tc>, window_params = [{transform_indices = @transform_0, window_bounds = array<i64: 192, 4>}, {transform_indices = @transform_1, window_bounds = array<i64: 8, 24>}, {pipeline_mode = #tpu.pipeline_mode<synchronous>, transform_indices = @transform_2, window_bounds = array<i64: 4, 32>}, {transform_indices = @transform_3, window_bounds = array<i64: 1, 1, 32>}, {transform_indices = @transform_4, window_bounds = array<i64: 1, 1, 32>}, {transform_indices = @transform_5, window_bounds = array<i64: 8, 32>}]} {
    %c0_i32 = arith.constant 0 : i32
    %0 = arith.cmpi eq, %arg1, %c0_i32 : i32
    %1 = arith.extui %0 : i1 to i32
    %c0_i32_0 = arith.constant 0 : i32
    %2 = arith.cmpi ne, %1, %c0_i32_0 : i32
    scf.if %2 {
      %cst_26 = arith.constant 0.000000e+00 : f32
      %34 = vector.broadcast %cst_26 : f32 to vector<1x1x32xf32>
      %c0_27 = arith.constant 0 : index
      %c0_28 = arith.constant 0 : index
      %c0_29 = arith.constant 0 : index
      %35 = vector.load %arg5[%c0_27, %c0_28, %c0_29] : memref<1x1x32xf32, #tpu.memory_space<vmem>>, vector<1x1x32xf32>
      tpu.vector_store %arg5[%c0_27, %c0_28, %c0_29], %34 {strides = array<i32>} : memref<1x1x32xf32, #tpu.memory_space<vmem>>, vector<1x1x32xf32>,
      %cst_30 = arith.constant 0.000000e+00 : f32
      %36 = vector.broadcast %cst_30 : f32 to vector<1x1x32xf32>
      %c0_31 = arith.constant 0 : index
      %c0_32 = arith.constant 0 : index
      %c0_33 = arith.constant 0 : index
      %37 = vector.load %arg6[%c0_31, %c0_32, %c0_33] : memref<1x1x32xf32, #tpu.memory_space<vmem>>, vector<1x1x32xf32>
      tpu.vector_store %arg6[%c0_31, %c0_32, %c0_33], %36 {strides = array<i32>} : memref<1x1x32xf32, #tpu.memory_space<vmem>>, vector<1x1x32xf32>,
    } else {
    }
    %c0 = arith.constant 0 : index
    %c0_1 = arith.constant 0 : index
    %3 = vector.load %arg2[%c0, %c0_1] : memref<192x4xf32, #tpu.memory_space<vmem>>, vector<192x4xf32>
    %c0_2 = arith.constant 0 : index
    %c0_3 = arith.constant 0 : index
    %4 = vector.load %arg4[%c0_2, %c0_3] : memref<4x32xf32, #tpu.memory_space<vmem>>, vector<4x32xf32>
    %cst = arith.constant dense<0.000000e+00> : vector<192x32xf32>
    %5 = tpu.matmul %3, %4, %cst {dimension_numbers = #tpu.dot_dimension_numbers<[1], [0], [0], [1], [0, 0, 1, 1], [], []>} : vector<192x4xf32>, vector<4x32xf32>, vector<192x32xf32> -> vector<192x32xf32>
    %c0_4 = arith.constant 0 : index
    %c0_5 = arith.constant 0 : index
    %c0_6 = arith.constant 0 : index
    %6 = vector.load %arg5[%c0_4, %c0_5, %c0_6] : memref<1x1x32xf32, #tpu.memory_space<vmem>>, vector<1x1x32xf32>
    %cst_7 = arith.constant dense<0.000000e+00> : vector<32xf32>
    %7 = vector.multi_reduction <add>, %5, %cst_7 [0] : vector<192x32xf32> to vector<32xf32>
    %8 = vector.shape_cast %7 : vector<32xf32> to vector<1x32xf32>
    %9 = vector.shape_cast %8 : vector<1x32xf32> to vector<1x1x32xf32>
    %10 = arith.addf %6, %9 : vector<1x1x32xf32>
    %c0_8 = arith.constant 0 : index
    %c0_9 = arith.constant 0 : index
    %c0_10 = arith.constant 0 : index
    %11 = vector.load %arg5[%c0_8, %c0_9, %c0_10] : memref<1x1x32xf32, #tpu.memory_space<vmem>>, vector<1x1x32xf32>
    tpu.vector_store %arg5[%c0_8, %c0_9, %c0_10], %10 {strides = array<i32>} : memref<1x1x32xf32, #tpu.memory_space<vmem>>, vector<1x1x32xf32>,
    %c0_11 = arith.constant 0 : index
    %c0_12 = arith.constant 0 : index
    %c0_13 = arith.constant 0 : index
    %12 = vector.load %arg6[%c0_11, %c0_12, %c0_13] : memref<1x1x32xf32, #tpu.memory_space<vmem>>, vector<1x1x32xf32>
    %13 = arith.mulf %5, %5 : vector<192x32xf32>
    %cst_14 = arith.constant dense<0.000000e+00> : vector<32xf32>
    %14 = vector.multi_reduction <add>, %13, %cst_14 [0] : vector<192x32xf32> to vector<32xf32>
    %15 = vector.shape_cast %14 : vector<32xf32> to vector<1x32xf32>
    %16 = vector.shape_cast %15 : vector<1x32xf32> to vector<1x1x32xf32>
    %17 = arith.addf %12, %16 : vector<1x1x32xf32>
    %c0_15 = arith.constant 0 : index
    %c0_16 = arith.constant 0 : index
    %c0_17 = arith.constant 0 : index
    %18 = vector.load %arg6[%c0_15, %c0_16, %c0_17] : memref<1x1x32xf32, #tpu.memory_space<vmem>>, vector<1x1x32xf32>
    tpu.vector_store %arg6[%c0_15, %c0_16, %c0_17], %17 {strides = array<i32>} : memref<1x1x32xf32, #tpu.memory_space<vmem>>, vector<1x1x32xf32>,
    %c0_18 = arith.constant 0 : index
    %c0_19 = arith.constant 0 : index
    %19 = vector.load %arg3[%c0_18, %c0_19] : memref<8x24xf32, #tpu.memory_space<vmem>>, vector<8x24xf32>
    %20 = vector.shape_cast %19 : vector<8x24xf32> to vector<8x24x1xf32>
    %cst_20 = arith.constant 0.000000e+00 : f32
    %21 = vector.broadcast %cst_20 : f32 to vector<8x24x1xf32>
    %22 = arith.cmpf ogt, %20, %21 : vector<8x24x1xf32>
    %23 = arith.extui %22 : vector<8x24x1xi1> to vector<8x24x1xi32>
    %24 = arith.sitofp %23 : vector<8x24x1xi32> to vector<8x24x1xf32>
    %25 = vector.shape_cast %5 : vector<192x32xf32> to vector<8x24x32xf32>
    %cst_21 = arith.constant 1.000000e+00 : f32
    %26 = vector.broadcast %cst_21 : f32 to vector<8x24x1xf32>
    %27 = arith.subf %24, %26 : vector<8x24x1xf32>
    %cst_22 = arith.constant 1.000000e+30 : f32
    %28 = vector.broadcast %cst_22 : f32 to vector<8x24x1xf32>
    %29 = arith.mulf %27, %28 : vector<8x24x1xf32>
    %30 = vector.broadcast %29 : vector<8x24x1xf32> to vector<8x24x32xf32>
    %31 = arith.addf %25, %30 : vector<8x24x32xf32>
    %cst_23 = arith.constant dense<0xFF800000> : vector<8x32xf32>
    %32 = vector.multi_reduction <maximumf>, %31, %cst_23 [1] : vector<8x24x32xf32> to vector<8x32xf32>
    %c0_24 = arith.constant 0 : index
    %c0_25 = arith.constant 0 : index
    %33 = vector.load %arg7[%c0_24, %c0_25] : memref<8x32xf32, #tpu.memory_space<vmem>>, vector<8x32xf32>
    tpu.vector_store %arg7[%c0_24, %c0_25], %32 {strides = array<i32>} : memref<8x32xf32, #tpu.memory_space<vmem>>, vector<8x32xf32>,
    return
  }
  func.func @transform_0(%arg0: i32, %arg1: i32) -> (i32, i32) {
    %c2_i32 = arith.constant 2 : i32
    %0 = arith.muli %arg0, %c2_i32 : i32
    %1 = arith.addi %0, %arg1 : i32
    %c0_i32 = arith.constant 0 : i32
    %c0_i32_0 = arith.constant 0 : i32
    return %1, %c0_i32 : i32, i32
  }
  func.func @transform_1(%arg0: i32, %arg1: i32) -> (i32, i32) {
    %c2_i32 = arith.constant 2 : i32
    %0 = arith.muli %arg0, %c2_i32 : i32
    %1 = arith.addi %0, %arg1 : i32
    %c0_i32 = arith.constant 0 : i32
    %c0_i32_0 = arith.constant 0 : i32
    return %1, %c0_i32 : i32, i32
  }
  func.func @transform_2(%arg0: i32, %arg1: i32) -> (i32, i32) {
    %c0_i32 = arith.constant 0 : i32
    %c0_i32_0 = arith.constant 0 : i32
    %c0_i32_1 = arith.constant 0 : i32
    return %c0_i32, %c0_i32_0 : i32, i32
  }
  func.func @transform_3(%arg0: i32, %arg1: i32) -> (i32, i32, i32) {
    %c0_i32 = arith.constant 0 : i32
    %c0_i32_0 = arith.constant 0 : i32
    %c0_i32_1 = arith.constant 0 : i32
    return %arg0, %c0_i32, %c0_i32_0 : i32, i32, i32
  }
  func.func @transform_4(%arg0: i32, %arg1: i32) -> (i32, i32, i32) {
    %c0_i32 = arith.constant 0 : i32
    %c0_i32_0 = arith.constant 0 : i32
    %c0_i32_1 = arith.constant 0 : i32
    return %arg0, %c0_i32, %c0_i32_0 : i32, i32, i32
  }
  func.func @transform_5(%arg0: i32, %arg1: i32) -> (i32, i32) {
    %c2_i32 = arith.constant 2 : i32
    %0 = arith.muli %arg0, %c2_i32 : i32
    %1 = arith.addi %0, %arg1 : i32
    %c0_i32 = arith.constant 0 : i32
    %c0_i32_0 = arith.constant 0 : i32
    return %1, %c0_i32 : i32, i32
  }
}

</mosaic_0001>

<llo_original>
// kernel: tpu_custom_call.1
$region0: #{tpu_custom_call.1}
  #allocation0 [shape = 'u32[]', space=smem, size = 0x4, offset = 0x4, fixed_abs, tag = 'smem constant byte address 0x4 - core index']
  #allocation1 [shape = 'u32[144,128]{1,0:T(1,128)}', space=vmem, size = 0x12000, scoped, tag = 'internal scratch']
  %s0 = inlined_call_operand.vmem [shape: f32[768,4], index: 0, kind: input, shape index: {}]
  %s1 = inlined_call_operand.vmem [shape: f32[32,24], index: 1, kind: input, shape index: {}]
  %s2 = inlined_call_operand.vmem [shape: f32[4,32], index: 2, kind: input, shape index: {}]
  %s3 = inlined_call_operand.hbm [shape: f32[2,1,32], index: 3, kind: output, shape index: {0}]
  %s4 = inlined_call_operand.hbm [shape: f32[2,1,32], index: 4, kind: output, shape index: {1}]
  %s5 = inlined_call_operand.hbm [shape: f32[32,32], index: 5, kind: output, shape index: {2}]
  %6 = xla_tuple %s3, %s4, %s5
  %s7 = sld [smem:[#allocation0]]
  $region65: #{tpu_custom_call.1} parent=0
    _
  %s9 = ssub.s32 1, %s7
  %s10 = scalar_select 0, %s9, %s7
  $region1: #{tpu_custom_call.1} parent=0
    #allocation2 [shape = 'u8[1024]{0}', space=vmem, size = 0x400, scoped, tag = 'output window, operand 0']
    #allocation3 [shape = 's32[2]{0}', space=sflag, size = 0x8, scoped, tag = 'scoped memory for tpu_custom_call.1']
    #allocation4 [shape = 'u8[1024]{0}', space=vmem, size = 0x400, scoped, tag = 'output window, operand 1']
    #allocation5 [shape = 's32[2]{0}', space=sflag, size = 0x8, scoped, tag = 'scoped memory for tpu_custom_call.1']
    #allocation6 [shape = 'u8[8192]{0}', space=vmem, size = 0x2000, scoped, tag = 'output window, operand 2']
    %11 = vsyncpa [#allocation3], 0
    %s12 = scalar_lea.sflag [#allocation3], 1
    %13 = vsyncpa %s12, 0
    %14 = vsyncpa [#allocation5], 0
    %s15 = scalar_lea.sflag [#allocation5], 1
    %16 = vsyncpa %s15, 0
    loop: start=0, step=1, limit=6
    $region2: #{tpu_custom_call.1} parent=1 // loop_pre_header
      _
    $region3: #{tpu_custom_call.1} parent=1 // loop_header
      %s18 = sphi 0, %s22
      %p19 = scmp.ge.s32.totalorder %s18, 6
      %s25 = sphi 0, %s37
      %s26 = sphi 0, %s33
      %s27 = sphi 0, %s25
      %s28 = sphi 0, %s26
      %s29 = sphi 0, %s27
      %s30 = sphi 0, %s28
      %s44 = sphi 0, %s46
      %s47 = sphi 0, %s44
      %s48 = sphi 0, %s47
      %s64 = sphi 0, %s48
      %s74 = sphi 0, %s76
      %s77 = sphi 0, %s74
      %s78 = sphi 0, %s77
      %s94 = sphi 0, %s78
      %s98 = sphi 0, %s98
      %s100 = sphi 0, %s98
      %s101 = sphi 0, %s100
      %s115 = sphi 0, %s101
      %s121 = sphi 0, %s123
      %s124 = sphi 0, %s121
      %s125 = sphi 0, %s124
      %s141 = sphi 0, %s125
      %s147 = sphi 0, %s149
      %s150 = sphi 0, %s147
      %s151 = sphi 0, %s150
      %s167 = sphi 0, %s151
      %s177 = sphi 0, %s179
      %s180 = sphi 0, %s177
      %s181 = sphi 0, %s180
      %s197 = sphi 0, %s181
    $region4: #{tpu_custom_call.1} parent=1 // loop_header_branch
      %21 = sbr.rel (%p19) target = $region8
    $region5: #{tpu_custom_call.1} parent=1 // loop_body
      %s23 = ssub.s32 %s18, 1
      %s24 = ssub.s32 %s18, 2
      %s31 = sadd.s32 1, %s26
      %p32 = scmp.ge.s32.totalorder %s31, 2
      %s33 = scalar_select %p32, 0, %s31
      %s34 = sadd.s32 1, %s25
      %s35 = scalar_select %p32, %s34, %s25
      %p36 = scmp.ge.s32.totalorder %s35, 2
      %s37 = scalar_select %p36, 0, %s35
      %s38 = smul.u32 %s25, 2
      %s39 = sadd.s32 %s38, %s26
      %s40 = smul.u32 %s37, 2
      %s41 = sadd.s32 %s40, %s33
      %s42 = ssub.s32 %s39, %s41
      %p43 = scmp.eq.s32.totalorder %s42, 0
      %s45 = sadd.s32 %s44, 1
      %s46 = scalar_select %p43, %s44, %s45
      %p49 = pneg %p43
      %p50 = scmp.eq.s32.totalorder %s18, 3
      %p51 = por %p49, %p50
      %p52 = scmp.ne.s32.totalorder %s44, %s47
      %p53 = scmp.eq.s32.totalorder %s18, 0
      %p54 = por %p52, %p53
      %p55 = scmp.ne.s32.totalorder %s44, %s47
      %p56 = scmp.eq.s32.totalorder %s23, 3
      %p57 = por %p55, %p56
      %p58 = scmp.ne.s32.totalorder %s47, %s48
      %p59 = scmp.eq.s32.totalorder %s23, 0
      %p60 = por %p58, %p59
      %p61 = scmp.ne.s32.totalorder %s47, %s48
      %p62 = scmp.eq.s32.totalorder %s24, 3
      %p63 = por %p61, %p62
      %p65 = scmp.ne.s32.totalorder %s48, %s64
      %p66 = scmp.eq.s32.totalorder %s24, 0
      %p67 = por %p65, %p66
      %s68 = smul.u32 %s25, 2
      %s69 = sadd.s32 %s68, %s26
      %s70 = smul.u32 %s37, 2
      %s71 = sadd.s32 %s70, %s33
      %s72 = ssub.s32 %s69, %s71
      %p73 = scmp.eq.s32.totalorder %s72, 0
      %s75 = sadd.s32 %s74, 1
      %s76 = scalar_select %p73, %s74, %s75
      %p79 = pneg %p73
      %p80 = scmp.eq.s32.totalorder %s18, 3
      %p81 = por %p79, %p80
      %p82 = scmp.ne.s32.totalorder %s74, %s77
      %p83 = scmp.eq.s32.totalorder %s18, 0
      %p84 = por %p82, %p83
      %p85 = scmp.ne.s32.totalorder %s74, %s77
      %p86 = scmp.eq.s32.totalorder %s23, 3
      %p87 = por %p85, %p86
      %p88 = scmp.ne.s32.totalorder %s77, %s78
      %p89 = scmp.eq.s32.totalorder %s23, 0
      %p90 = por %p88, %p89
      %p91 = scmp.ne.s32.totalorder %s77, %s78
      %p92 = scmp.eq.s32.totalorder %s24, 3
      %p93 = por %p91, %p92
      %p95 = scmp.ne.s32.totalorder %s78, %s94
      %p96 = scmp.eq.s32.totalorder %s24, 0
      %p97 = por %p95, %p96
      %s99 = sadd.s32 %s98, 1
      %p102 = scmp.eq.s32.totalorder %s18, 3
      %p103 = scmp.ne.s32.totalorder %s98, %s100
      %p104 = scmp.eq.s32.totalorder %s18, 0
      %p105 = por %p103, %p104
      %p106 = scmp.ne.s32.totalorder %s98, %s100
      %p107 = scmp.eq.s32.totalorder %s23, 3
      %p108 = por %p106, %p107
      %p109 = scmp.ne.s32.totalorder %s100, %s101
      %p110 = scmp.eq.s32.totalorder %s23, 0
      %p111 = por %p109, %p110
      %p112 = scmp.ne.s32.totalorder %s100, %s101
      %p113 = scmp.eq.s32.totalorder %s24, 3
      %p114 = por %p112, %p113
      %p116 = scmp.ne.s32.totalorder %s101, %s115
      %p117 = scmp.eq.s32.totalorder %s24, 0
      %p118 = por %p116, %p117
      %s119 = ssub.s32 %s25, %s37
      %p120 = scmp.eq.s32.totalorder %s119, 0
      %s122 = sadd.s32 %s121, 1
      %s123 = scalar_select %p120, %s121, %s122
      %p126 = pneg %p120
      %p127 = scmp.eq.s32.totalorder %s18, 3
      %p128 = por %p126, %p127
      %p129 = scmp.ne.s32.totalorder %s121, %s124
      %p130 = scmp.eq.s32.totalorder %s18, 0
      %p131 = por %p129, %p130
      %p132 = scmp.ne.s32.totalorder %s121, %s124
      %p133 = scmp.eq.s32.totalorder %s23, 3
      %p134 = por %p132, %p133
      %p135 = scmp.ne.s32.totalorder %s124, %s125
      %p136 = scmp.eq.s32.totalorder %s23, 0
      %p137 = por %p135, %p136
      %p138 = scmp.ne.s32.totalorder %s124, %s125
      %p139 = scmp.eq.s32.totalorder %s24, 3
      %p140 = por %p138, %p139
      %p142 = scmp.ne.s32.totalorder %s125, %s141
      %p143 = scmp.eq.s32.totalorder %s24, 0
      %p144 = por %p142, %p143
      %s145 = ssub.s32 %s25, %s37
      %p146 = scmp.eq.s32.totalorder %s145, 0
      %s148 = sadd.s32 %s147, 1
      %s149 = scalar_select %p146, %s147, %s148
      %p152 = pneg %p146
      %p153 = scmp.eq.s32.totalorder %s18, 3
      %p154 = por %p152, %p153
      %p155 = scmp.ne.s32.totalorder %s147, %s150
      %p156 = scmp.eq.s32.totalorder %s18, 0
      %p157 = por %p155, %p156
      %p158 = scmp.ne.s32.totalorder %s147, %s150
      %p159 = scmp.eq.s32.totalorder %s23, 3
      %p160 = por %p158, %p159
      %p161 = scmp.ne.s32.totalorder %s150, %s151
      %p162 = scmp.eq.s32.totalorder %s23, 0
      %p163 = por %p161, %p162
      %p164 = scmp.ne.s32.totalorder %s150, %s151
      %p165 = scmp.eq.s32.totalorder %s24, 3
      %p166 = por %p164, %p165
      %p168 = scmp.ne.s32.totalorder %s151, %s167
      %p169 = scmp.eq.s32.totalorder %s24, 0
      %p170 = por %p168, %p169
      %s171 = smul.u32 %s25, 2
      %s172 = sadd.s32 %s171, %s26
      %s173 = smul.u32 %s37, 2
      %s174 = sadd.s32 %s173, %s33
      %s175 = ssub.s32 %s172, %s174
      %p176 = scmp.eq.s32.totalorder %s175, 0
      %s178 = sadd.s32 %s177, 1
      %s179 = scalar_select %p176, %s177, %s178
      %p182 = pneg %p176
      %p183 = scmp.eq.s32.totalorder %s18, 3
      %p184 = por %p182, %p183
      %p185 = scmp.ne.s32.totalorder %s177, %s180
      %p186 = scmp.eq.s32.totalorder %s18, 0
      %p187 = por %p185, %p186
      %p188 = scmp.ne.s32.totalorder %s177, %s180
      %p189 = scmp.eq.s32.totalorder %s23, 3
      %p190 = por %p188, %p189
      %p191 = scmp.ne.s32.totalorder %s180, %s181
      %p192 = scmp.eq.s32.totalorder %s23, 0
      %p193 = por %p191, %p192
      %p194 = scmp.ne.s32.totalorder %s180, %s181
      %p195 = scmp.eq.s32.totalorder %s24, 3
      %p196 = por %p194, %p195
      %p198 = scmp.ne.s32.totalorder %s181, %s197
      %p199 = scmp.eq.s32.totalorder %s24, 0
      %p200 = por %p198, %p199
      %p201 = scmp.le.s32.totalorder 1, %s18
      %p202 = scmp.lt.s32.totalorder %s18, 5
      %p203 = pnand %p201, %p202
      %p204 = pneg %p203
      // Predicated region
      $region9: #{tpu_custom_call.1} parent=5 // pred_check
        _
      $region10: #{tpu_custom_call.1} parent=5 // pred_check_branch
        %206 = sbr.rel (%p203) target = $region12
      $region11: #{tpu_custom_call.1} parent=5 // pred_region
        %s207 = ssub.s32 %s18, 1
        // Predicated region
        $region13: #{tpu_custom_call.1} parent=11 // pred_check
          %p208 = pneg %p111
        $region14: #{tpu_custom_call.1} parent=11 // pred_check_branch
          %210 = sbr.rel (%p208) target = $region16
        $region15: #{tpu_custom_call.1} parent=11 // pred_region
          _
        $region16: #{tpu_custom_call.1} parent=11 // pred_fallthru
          _
      $region12: #{tpu_custom_call.1} parent=5 // pred_fallthru
        _
      %p211 = scmp.lt.s32.totalorder %s18, 4
      // Predicated region
      $region17: #{tpu_custom_call.1} parent=5 // pred_check
        %p212 = pneg %p211
      $region18: #{tpu_custom_call.1} parent=5 // pred_check_branch
        %214 = sbr.rel (%p212) target = $region20
      $region19: #{tpu_custom_call.1} parent=5 // pred_region
        // Predicated region
        $region21: #{tpu_custom_call.1} parent=19 // pred_check
          %p215 = pneg %p54
        $region22: #{tpu_custom_call.1} parent=19 // pred_check_branch
          %217 = sbr.rel (%p215) target = $region24
        $region23: #{tpu_custom_call.1} parent=19 // pred_region
          %s218 = smul.u32 %s25, 2
          %s219 = sadd.s32 %s218, %s26
          %s220 = smul.u32 24, %s219
          %p221 = scmp.lt.s32.totalorder %s220, 95
          %s222 = scalar_select %p221, %s220, 95
          %s223 = smul.addr %s222, 8
          %s224 = scalar_lea.vmem %s0, %s223
          %s225 = smul.u32 %s25, 2
          %s226 = sadd.s32 %s225, %s26
          %s227 = smul.u32 24, %s226
        $region24: #{tpu_custom_call.1} parent=19 // pred_fallthru
          _
        // Predicated region
        $region25: #{tpu_custom_call.1} parent=19 // pred_check
          %p228 = pneg %p84
        $region26: #{tpu_custom_call.1} parent=19 // pred_check_branch
          %230 = sbr.rel (%p228) target = $region28
        $region27: #{tpu_custom_call.1} parent=19 // pred_region
          %s231 = smul.u32 %s25, 2
          %s232 = sadd.s32 %s231, %s26
          %p233 = scmp.lt.s32.totalorder %s232, 3
          %s234 = scalar_select %p233, %s232, 3
          %s235 = smul.addr %s234, 8
          %s236 = scalar_lea.vmem %s1, %s235
          %s237 = smul.u32 %s25, 2
          %s238 = sadd.s32 %s237, %s26
        $region28: #{tpu_custom_call.1} parent=19 // pred_fallthru
          _
      $region20: #{tpu_custom_call.1} parent=5 // pred_fallthru
        _
      %p239 = scmp.le.s32.totalorder 1, %s18
      %p240 = scmp.lt.s32.totalorder %s18, 5
      %p241 = pnand %p239, %p240
      %p242 = pneg %p241
      // Predicated region
      $region29: #{tpu_custom_call.1} parent=5 // pred_check
        _
      $region30: #{tpu_custom_call.1} parent=5 // pred_check_branch
        %244 = sbr.rel (%p241) target = $region32
      $region31: #{tpu_custom_call.1} parent=5 // pred_region
        %s245 = ssub.s32 %s18, 1
        %s246 = smul.u32 %s27, 2
        %s247 = sadd.s32 %s246, %s28
        %s248 = smul.u32 24, %s247
        %p249 = scmp.lt.s32.totalorder %s248, 95
        %s250 = scalar_select %p249, %s248, 95
        %s251 = smul.addr %s250, 8
        %s252 = scalar_lea.vmem %s0, %s251
        %p253 = pneg %p60
        %p254 = pneg %p57
        %s255 = smul.u32 %s27, 2
        %s256 = sadd.s32 %s255, %s28
        %p257 = scmp.lt.s32.totalorder %s256, 3
        %s258 = scalar_select %p257, %s256, 3
        %s259 = smul.addr %s258, 8
        %s260 = scalar_lea.vmem %s1, %s259
        %p261 = pneg %p90
        %p262 = pneg %p87
        %p263 = pneg %p111
        %p264 = pneg %p108
        %p265 = pneg %p137
        %p266 = pneg %p134
        %s267 = sand.u32 %s124, 1
        %s268 = scalar_lea.sflag [#allocation3], %s267
        %s269 = sand.u32 %s124, 1
        %s270 = scalar_lea.vmem [#allocation2], %s269
        %p271 = pneg %p163
        %p272 = pneg %p160
        %s273 = sand.u32 %s23, 1
        %s274 = scalar_lea.sflag [#allocation5], %s273
        %s275 = sand.u32 %s150, 1
        %s276 = scalar_lea.vmem [#allocation4], %s275
        %p277 = pneg %p193
        %p278 = pneg %p190
        %s279 = sand.u32 %s23, 1
        %s280 = scalar_lea.sflag [#allocation5], %s279
        %s281 = sand.u32 %s180, 1
        %s282 = smul.addr %s281, 8
        %s283 = scalar_lea.vmem [#allocation6], %s282
        %s284 = smul.u32 %s27, 2
        %s285 = sadd.s32 %s284, %s28
        %s286 = smul.u32 24, %s285
        %p287 = scmp.lt.s32.totalorder %s286, 95
        %s288 = scalar_select %p287, %s286, 95
        %s289 = smul.addr %s288, 8
        %s290 = scalar_lea.vmem %s0, %s289
        %s291 = smul.u32 %s27, 2
        %s292 = sadd.s32 %s291, %s28
        %s293 = smul.u32 24, %s292
        %s294 = smul.u32 %s27, 2
        %s295 = sadd.s32 %s294, %s28
        %p296 = scmp.lt.s32.totalorder %s295, 3
        %s297 = scalar_select %p296, %s295, 3
        %s298 = smul.addr %s297, 8
        %s299 = scalar_lea.vmem %s1, %s298
        %s300 = smul.u32 %s27, 2
        %s301 = sadd.s32 %s300, %s28
        %s302 = smul.u32 %s27, 2
        %s303 = sadd.s32 %s302, %s28
        %p304 = scmp.eq.s32.totalorder %s28, 0
        // Predicated region
        $region33: #{tpu_custom_call.1} parent=31 // pred_check
          %p305 = pneg %p304
        $region34: #{tpu_custom_call.1} parent=31 // pred_check_branch
          %307 = sbr.rel (%p305) target = $region36
        $region35: #{tpu_custom_call.1} parent=31 // pred_region
          %vm308 = vcmask 253952
          %309 = vst.msk [vmem:[%s270] sm:$0x1] %vm308, 0.0
          %310 = vst.msk [vmem:[%s276] sm:$0x1] %vm308, 0.0
        $region36: #{tpu_custom_call.1} parent=31 // pred_fallthru
          _
        %v311 = vld [vmem:[%s290] sm:$0xff]
        %v312 = vld [vmem:[%s290 + $0x8] sm:$0xff]
        %v313 = vld [vmem:[%s290 + $0x10] sm:$0xff]
        %v314 = vld [vmem:[%s290 + $0x18] sm:$0xff]
        %v315 = vld [vmem:[%s290 + $0x20] sm:$0xff]
        %v316 = vld [vmem:[%s290 + $0x28] sm:$0xff]
        %v317 = vld [vmem:[%s290 + $0x30] sm:$0xff]
        %v318 = vld [vmem:[%s290 + $0x38] sm:$0xff]
        %v319 = vld [vmem:[%s290 + $0x40] sm:$0xff]
        %v320 = vld [vmem:[%s290 + $0x48] sm:$0xff]
        %v321 = vld [vmem:[%s290 + $0x50] sm:$0xff]
        %v322 = vld [vmem:[%s290 + $0x58] sm:$0xff]
        %v323 = vld [vmem:[%s290 + $0x60] sm:$0xff]
        %v324 = vld [vmem:[%s290 + $0x68] sm:$0xff]
        %v325 = vld [vmem:[%s290 + $0x70] sm:$0xff]
        %v326 = vld [vmem:[%s290 + $0x78] sm:$0xff]
        %v327 = vld [vmem:[%s290 + $0x80] sm:$0xff]
        %v328 = vld [vmem:[%s290 + $0x88] sm:$0xff]
        %v329 = vld [vmem:[%s290 + $0x90] sm:$0xff]
        %v330 = vld [vmem:[%s290 + $0x98] sm:$0xff]
        %v331 = vld [vmem:[%s290 + $0xa0] sm:$0xff]
        %v332 = vld [vmem:[%s290 + $0xa8] sm:$0xff]
        %v333 = vld [vmem:[%s290 + $0xb0] sm:$0xff]
        %v334 = vld [vmem:[%s290 + $0xb8] sm:$0xff]
        %v335 = vld [vmem:[%s2] sm:$0xf]
        %vm336 = vcmask 31744
        %v338 = vsel %vm336, %v311, 0
        %v341 = vsel %vm336, %v312, 0
        %v344 = vsel %vm336, %v313, 0
        %v347 = vsel %vm336, %v314, 0
        %v350 = vsel %vm336, %v315, 0
        %v353 = vsel %vm336, %v316, 0
        %v356 = vsel %vm336, %v317, 0
        %v359 = vsel %vm336, %v318, 0
        %v362 = vsel %vm336, %v319, 0
        %v365 = vsel %vm336, %v320, 0
        %v368 = vsel %vm336, %v321, 0
        %v371 = vsel %vm336, %v322, 0
        %v374 = vsel %vm336, %v323, 0
        %v377 = vsel %vm336, %v324, 0
        %v380 = vsel %vm336, %v325, 0
        %v383 = vsel %vm336, %v326, 0
        %v386 = vsel %vm336, %v327, 0
        %v389 = vsel %vm336, %v328, 0
        %v392 = vsel %vm336, %v329, 0
        %v395 = vsel %vm336, %v330, 0
        %v398 = vsel %vm336, %v331, 0
        %v401 = vsel %vm336, %v332, 0
        %v404 = vsel %vm336, %v333, 0
        %v407 = vsel %vm336, %v334, 0
        %vm409 = vcmask 1043456
        %v411 = vsel %vm409, %v335, 0
        %413 = vmatprep.subr.mxu0 0.0
        %414 = vmatpush1.msra.mxu0 0.0
        %415 = vmatprep.subr.mxu0 0.0
        %416 = vmatpush1.msra.mxu0 0.0
        %417 = vmatprep.subr.mxu0 0.0
        %418 = vmatpush1.msra.mxu0 0.0
        %419 = vmatprep.subr.mxu0 0.0
        %420 = vmatpush1.msra.mxu0 0.0
        %421 = vmatprep.subr.mxu0 0.0
        %422 = vmatpush1.msra.mxu0 0.0
        %423 = vmatprep.subr.mxu0 0.0
        %424 = vmatpush1.msra.mxu0 0.0
        %425 = vmatprep.subr.mxu0 0.0
        %426 = vmatpush1.msra.mxu0 0.0
        %427 = vmatprep.subr.mxu0 0.0
        %428 = vmatpush1.msra.mxu0 0.0
        %429 = vmatprep.subr.mxu0 0.0
        %430 = vmatpush1.msra.mxu0 0.0
        %431 = vmatprep.subr.mxu0 0.0
        %432 = vmatpush1.msra.mxu0 0.0
        %433 = vmatprep.subr.mxu0 0.0
        %434 = vmatpush1.msra.mxu0 0.0
        %435 = vmatprep.subr.mxu0 0.0
        %436 = vmatpush1.msra.mxu0 0.0
        %437 = vmatprep.subr.mxu0 0.0
        %438 = vmatpush1.msra.mxu0 0.0
        %439 = vmatprep.subr.mxu0 0.0
        %440 = vmatpush1.msra.mxu0 0.0
        %441 = vmatprep.subr.mxu0 0.0
        %442 = vmatpush1.msra.mxu0 0.0
        %443 = vmatprep.subr.mxu0 0.0
        %444 = vmatpush1.msra.mxu0 %v411
        %445 = vmatprep.subr.mxu0 0.0
        %446 = vmatpush2.msra.mxu0 0.0
        %447 = vmatprep.subr.mxu0 0.0
        %448 = vmatpush2.msra.mxu0 0.0
        %449 = vmatprep.subr.mxu0 0.0
        %450 = vmatpush2.msra.mxu0 0.0
        %451 = vmatprep.subr.mxu0 0.0
        %452 = vmatpush2.msra.mxu0 0.0
        %453 = vmatprep.subr.mxu0 0.0
        %454 = vmatpush2.msra.mxu0 0.0
        %455 = vmatprep.subr.mxu0 0.0
        %456 = vmatpush2.msra.mxu0 0.0
        %457 = vmatprep.subr.mxu0 0.0
        %458 = vmatpush2.msra.mxu0 0.0
        %459 = vmatprep.subr.mxu0 0.0
        %460 = vmatpush2.msra.mxu0 0.0
        %461 = vmatprep.subr.mxu0 0.0
        %462 = vmatpush2.msra.mxu0 0.0
        %463 = vmatprep.subr.mxu0 0.0
        %464 = vmatpush2.msra.mxu0 0.0
        %465 = vmatprep.subr.mxu0 0.0
        %466 = vmatpush2.msra.mxu0 0.0
        %467 = vmatprep.subr.mxu0 0.0
        %468 = vmatpush2.msra.mxu0 0.0
        %469 = vmatprep.subr.mxu0 0.0
        %470 = vmatpush2.msra.mxu0 0.0
        %471 = vmatprep.subr.mxu0 0.0
        %472 = vmatpush2.msra.mxu0 0.0
        %473 = vmatprep.subr.mxu0 0.0
        %474 = vmatpush2.msra.mxu0 0.0
        %475 = vmatprep.subr.mxu0 0.0
        %476 = vmatpush2.msra.mxu0 0.0
        %477 = vmatprep.mubr.f32.mxu0 0.0
        %478 = vmatmul.mubr.f32.gmra.mxu0 %v338
        %v479 = vpop.f32.mrf.mxu0
        %v480 = vadd.f32 0.0, %v479
        %v481 = vpop.f32.mrf.mxu0
        %482 = vmatprep.mubr.f32.mxu0 0.0
        %483 = vmatmul.mubr.f32.gmra.mxu0 %v341
        %v484 = vpop.f32.mrf.mxu0
        %v485 = vadd.f32 0.0, %v484
        %v486 = vpop.f32.mrf.mxu0
        %487 = vmatprep.mubr.f32.mxu0 0.0
        %488 = vmatmul.mubr.f32.gmra.mxu0 %v344
        %v489 = vpop.f32.mrf.mxu0
        %v490 = vadd.f32 0.0, %v489
        %v491 = vpop.f32.mrf.mxu0
        %492 = vmatprep.mubr.f32.mxu0 0.0
        %493 = vmatmul.mubr.f32.gmra.mxu0 %v347
        %v494 = vpop.f32.mrf.mxu0
        %v495 = vadd.f32 0.0, %v494
        %v496 = vpop.f32.mrf.mxu0
        %497 = vmatprep.mubr.f32.mxu0 0.0
        %498 = vmatmul.mubr.f32.gmra.mxu0 %v350
        %v499 = vpop.f32.mrf.mxu0
        %v500 = vadd.f32 0.0, %v499
        %v501 = vpop.f32.mrf.mxu0
        %502 = vmatprep.mubr.f32.mxu0 0.0
        %503 = vmatmul.mubr.f32.gmra.mxu0 %v353
        %v504 = vpop.f32.mrf.mxu0
        %v505 = vadd.f32 0.0, %v504
        %v506 = vpop.f32.mrf.mxu0
        %507 = vmatprep.mubr.f32.mxu0 0.0
        %508 = vmatmul.mubr.f32.gmra.mxu0 %v356
        %v509 = vpop.f32.mrf.mxu0
        %v510 = vadd.f32 0.0, %v509
        %v511 = vpop.f32.mrf.mxu0
        %512 = vmatprep.mubr.f32.mxu0 0.0
        %513 = vmatmul.mubr.f32.gmra.mxu0 %v359
        %v514 = vpop.f32.mrf.mxu0
        %v515 = vadd.f32 0.0, %v514
        %v516 = vpop.f32.mrf.mxu0
        %517 = vmatprep.mubr.f32.mxu0 0.0
        %518 = vmatmul.mubr.f32.gmra.mxu0 %v362
        %v519 = vpop.f32.mrf.mxu0
        %v520 = vadd.f32 0.0, %v519
        %v521 = vpop.f32.mrf.mxu0
        %522 = vmatprep.mubr.f32.mxu0 0.0
        %523 = vmatmul.mubr.f32.gmra.mxu0 %v365
        %v524 = vpop.f32.mrf.mxu0
        %v525 = vadd.f32 0.0, %v524
        %v526 = vpop.f32.mrf.mxu0
        %527 = vmatprep.mubr.f32.mxu0 0.0
        %528 = vmatmul.mubr.f32.gmra.mxu0 %v368
        %v529 = vpop.f32.mrf.mxu0
        %v530 = vadd.f32 0.0, %v529
        %v531 = vpop.f32.mrf.mxu0
        %532 = vmatprep.mubr.f32.mxu0 0.0
        %533 = vmatmul.mubr.f32.gmra.mxu0 %v371
        %v534 = vpop.f32.mrf.mxu0
        %v535 = vadd.f32 0.0, %v534
        %v536 = vpop.f32.mrf.mxu0
        %537 = vmatprep.mubr.f32.mxu0 0.0
        %538 = vmatmul.mubr.f32.gmra.mxu0 %v374
        %v539 = vpop.f32.mrf.mxu0
        %v540 = vadd.f32 0.0, %v539
        %v541 = vpop.f32.mrf.mxu0
        %542 = vmatprep.mubr.f32.mxu0 0.0
        %543 = vmatmul.mubr.f32.gmra.mxu0 %v377
        %v544 = vpop.f32.mrf.mxu0
        %v545 = vadd.f32 0.0, %v544
        %v546 = vpop.f32.mrf.mxu0
        %547 = vmatprep.mubr.f32.mxu0 0.0
        %548 = vmatmul.mubr.f32.gmra.mxu0 %v380
        %v549 = vpop.f32.mrf.mxu0
        %v550 = vadd.f32 0.0, %v549
        %v551 = vpop.f32.mrf.mxu0
        %552 = vmatprep.mubr.f32.mxu0 0.0
        %553 = vmatmul.mubr.f32.gmra.mxu0 %v383
        %v554 = vpop.f32.mrf.mxu0
        %v555 = vadd.f32 0.0, %v554
        %v556 = vpop.f32.mrf.mxu0
        %557 = vmatprep.mubr.f32.mxu0 0.0
        %558 = vmatmul.mubr.f32.gmra.mxu0 %v386
        %v559 = vpop.f32.mrf.mxu0
        %v560 = vadd.f32 0.0, %v559
        %v561 = vpop.f32.mrf.mxu0
        %562 = vmatprep.mubr.f32.mxu0 0.0
        %563 = vmatmul.mubr.f32.gmra.mxu0 %v389
        %v564 = vpop.f32.mrf.mxu0
        %v565 = vadd.f32 0.0, %v564
        %v566 = vpop.f32.mrf.mxu0
        %567 = vmatprep.mubr.f32.mxu0 0.0
        %568 = vmatmul.mubr.f32.gmra.mxu0 %v392
        %v569 = vpop.f32.mrf.mxu0
        %v570 = vadd.f32 0.0, %v569
        %v571 = vpop.f32.mrf.mxu0
        %572 = vmatprep.mubr.f32.mxu0 0.0
        %573 = vmatmul.mubr.f32.gmra.mxu0 %v395
        %v574 = vpop.f32.mrf.mxu0
        %v575 = vadd.f32 0.0, %v574
        %v576 = vpop.f32.mrf.mxu0
        %577 = vmatprep.mubr.f32.mxu0 0.0
        %578 = vmatmul.mubr.f32.gmra.mxu0 %v398
        %v579 = vpop.f32.mrf.mxu0
        %v580 = vadd.f32 0.0, %v579
        %v581 = vpop.f32.mrf.mxu0
        %582 = vmatprep.mubr.f32.mxu0 0.0
        %583 = vmatmul.mubr.f32.gmra.mxu0 %v401
        %v584 = vpop.f32.mrf.mxu0
        %v585 = vadd.f32 0.0, %v584
        %v586 = vpop.f32.mrf.mxu0
        %587 = vmatprep.mubr.f32.mxu0 0.0
        %588 = vmatmul.mubr.f32.gmra.mxu0 %v404
        %v589 = vpop.f32.mrf.mxu0
        %v590 = vadd.f32 0.0, %v589
        %v591 = vpop.f32.mrf.mxu0
        %592 = vmatprep.mubr.f32.mxu0 0.0
        %593 = vmatmul.mubr.f32.gmra.mxu0 %v407
        %v594 = vpop.f32.mrf.mxu0
        %v595 = vadd.f32 0.0, %v594
        %v596 = vpop.f32.mrf.mxu0
        %597 = vdwg.mxu0
        %v598 = vld [vmem:[%s270] sm:$0x1]
        %vm599 = vcmask 261120
        %v600 = vsel %vm599, %v480, 0.0
        %v601 = vsel %vm599, %v485, 0.0
        %v602 = vadd.f32 %v600, %v601
        %v603 = vsel %vm599, %v490, 0.0
        %v604 = vadd.f32 %v602, %v603
        %v605 = vsel %vm599, %v495, 0.0
        %v606 = vadd.f32 %v604, %v605
        %v607 = vsel %vm599, %v500, 0.0
        %v608 = vadd.f32 %v606, %v607
        %v609 = vsel %vm599, %v505, 0.0
        %v610 = vadd.f32 %v608, %v609
        %v611 = vsel %vm599, %v510, 0.0
        %v612 = vadd.f32 %v610, %v611
        %v613 = vsel %vm599, %v515, 0.0
        %v614 = vadd.f32 %v612, %v613
        %v615 = vsel %vm599, %v520, 0.0
        %v616 = vadd.f32 %v614, %v615
        %v617 = vsel %vm599, %v525, 0.0
        %v618 = vadd.f32 %v616, %v617
        %v619 = vsel %vm599, %v530, 0.0
        %v620 = vadd.f32 %v618, %v619
        %v621 = vsel %vm599, %v535, 0.0
        %v622 = vadd.f32 %v620, %v621
        %v623 = vsel %vm599, %v540, 0.0
        %v624 = vadd.f32 %v622, %v623
        %v625 = vsel %vm599, %v545, 0.0
        %v626 = vadd.f32 %v624, %v625
        %v627 = vsel %vm599, %v550, 0.0
        %v628 = vadd.f32 %v626, %v627
        %v629 = vsel %vm599, %v555, 0.0
        %v630 = vadd.f32 %v628, %v629
        %v631 = vsel %vm599, %v560, 0.0
        %v632 = vadd.f32 %v630, %v631
        %v633 = vsel %vm599, %v565, 0.0
        %v634 = vadd.f32 %v632, %v633
        %v635 = vsel %vm599, %v570, 0.0
        %v636 = vadd.f32 %v634, %v635
        %v637 = vsel %vm599, %v575, 0.0
        %v638 = vadd.f32 %v636, %v637
        %v639 = vsel %vm599, %v580, 0.0
        %v640 = vadd.f32 %v638, %v639
        %v641 = vsel %vm599, %v585, 0.0
        %v642 = vadd.f32 %v640, %v641
        %v643 = vsel %vm599, %v590, 0.0
        %v644 = vadd.f32 %v642, %v643
        %v645 = vsel %vm599, %v595, 0.0
        %v646 = vadd.f32 %v644, %v645
        %v647 = vrot.slane %v646, 4
        %v648 = vadd.f32 %v646, %v647
        %v649 = vrot.slane %v648, 2
        %v650 = vadd.f32 %v648, %v649
        %v651 = vrot.slane %v650, 1
        %v652 = vadd.f32 %v650, %v651
        %v653 = vadd.f32 %v598, %v652
        %vm654 = vcmask 253952
        %655 = vst.msk [vmem:[%s270] sm:$0x1] %vm654, %v653
        %v656 = vld [vmem:[%s276] sm:$0x1]
        %v657 = vmul.f32 %v480, %v480
        %v658 = vmul.f32 %v485, %v485
        %v659 = vmul.f32 %v490, %v490
        %v660 = vmul.f32 %v495, %v495
        %v661 = vmul.f32 %v500, %v500
        %v662 = vmul.f32 %v505, %v505
        %v663 = vmul.f32 %v510, %v510
        %v664 = vmul.f32 %v515, %v515
        %v665 = vmul.f32 %v520, %v520
        %v666 = vmul.f32 %v525, %v525
        %v667 = vmul.f32 %v530, %v530
        %v668 = vmul.f32 %v535, %v535
        %v669 = vmul.f32 %v540, %v540
        %v670 = vmul.f32 %v545, %v545
        %v671 = vmul.f32 %v550, %v550
        %v672 = vmul.f32 %v555, %v555
        %v673 = vmul.f32 %v560, %v560
        %v674 = vmul.f32 %v565, %v565
        %v675 = vmul.f32 %v570, %v570
        %v676 = vmul.f32 %v575, %v575
        %v677 = vmul.f32 %v580, %v580
        %v678 = vmul.f32 %v585, %v585
        %v679 = vmul.f32 %v590, %v590
        %v680 = vmul.f32 %v595, %v595
        %v681 = vsel %vm599, %v657, 0.0
        %v682 = vsel %vm599, %v658, 0.0
        %v683 = vadd.f32 %v681, %v682
        %v684 = vsel %vm599, %v659, 0.0
        %v685 = vadd.f32 %v683, %v684
        %v686 = vsel %vm599, %v660, 0.0
        %v687 = vadd.f32 %v685, %v686
        %v688 = vsel %vm599, %v661, 0.0
        %v689 = vadd.f32 %v687, %v688
        %v690 = vsel %vm599, %v662, 0.0
        %v691 = vadd.f32 %v689, %v690
        %v692 = vsel %vm599, %v663, 0.0
        %v693 = vadd.f32 %v691, %v692
        %v694 = vsel %vm599, %v664, 0.0
        %v695 = vadd.f32 %v693, %v694
        %v696 = vsel %vm599, %v665, 0.0
        %v697 = vadd.f32 %v695, %v696
        %v698 = vsel %vm599, %v666, 0.0
        %v699 = vadd.f32 %v697, %v698
        %v700 = vsel %vm599, %v667, 0.0
        %v701 = vadd.f32 %v699, %v700
        %v702 = vsel %vm599, %v668, 0.0
        %v703 = vadd.f32 %v701, %v702
        %v704 = vsel %vm599, %v669, 0.0
        %v705 = vadd.f32 %v703, %v704
        %v706 = vsel %vm599, %v670, 0.0
        %v707 = vadd.f32 %v705, %v706
        %v708 = vsel %vm599, %v671, 0.0
        %v709 = vadd.f32 %v707, %v708
        %v710 = vsel %vm599, %v672, 0.0
        %v711 = vadd.f32 %v709, %v710
        %v712 = vsel %vm599, %v673, 0.0
        %v713 = vadd.f32 %v711, %v712
        %v714 = vsel %vm599, %v674, 0.0
        %v715 = vadd.f32 %v713, %v714
        %v716 = vsel %vm599, %v675, 0.0
        %v717 = vadd.f32 %v715, %v716
        %v718 = vsel %vm599, %v676, 0.0
        %v719 = vadd.f32 %v717, %v718
        %v720 = vsel %vm599, %v677, 0.0
        %v721 = vadd.f32 %v719, %v720
        %v722 = vsel %vm599, %v678, 0.0
        %v723 = vadd.f32 %v721, %v722
        %v724 = vsel %vm599, %v679, 0.0
        %v725 = vadd.f32 %v723, %v724
        %v726 = vsel %vm599, %v680, 0.0
        %v727 = vadd.f32 %v725, %v726
        %v728 = vrot.slane %v727, 4
        %v729 = vadd.f32 %v727, %v728
        %v730 = vrot.slane %v729, 2
        %v731 = vadd.f32 %v729, %v730
        %v732 = vrot.slane %v731, 1
        %v733 = vadd.f32 %v731, %v732
        %v734 = vadd.f32 %v656, %v733
        %735 = vst.msk [vmem:[%s276] sm:$0x1] %vm654, %v734
        %v736 = vld [vmem:[%s299] sm:$0xff]
        %v737 = vlaneseq
        %v738 = vshrl.u32 %v737, 7
        %v739 = vsub.s32 0, %v738
        %v740 = vrot.slane %v736, %v739
        %742 = vbcast.lane.b32.xlu0 %v740, 256
        %v743 = vpop.permute.xlu0 %742
        %s745 = sor.u32 256, 8
        %746 = vbcast.lane.b32.xlu0 %v740, %s745
        %v747 = vpop.permute.xlu0 %746
        %s749 = sor.u32 256, 16
        %750 = vbcast.lane.b32.xlu0 %v740, %s749
        %v751 = vpop.permute.xlu0 %750
        %v752 = vlaneseq
        %v753 = vshrl.u32 %v752, 7
        %v754 = vsub.s32 1, %v753
        %v755 = vrot.slane %v736, %v754
        %757 = vbcast.lane.b32.xlu0 %v755, 256
        %v758 = vpop.permute.xlu0 %757
        %s760 = sor.u32 256, 8
        %761 = vbcast.lane.b32.xlu0 %v755, %s760
        %v762 = vpop.permute.xlu0 %761
        %s764 = sor.u32 256, 16
        %765 = vbcast.lane.b32.xlu0 %v755, %s764
        %v766 = vpop.permute.xlu0 %765
        %v767 = vlaneseq
        %v768 = vshrl.u32 %v767, 7
        %v769 = vsub.s32 2, %v768
        %v770 = vrot.slane %v736, %v769
        %772 = vbcast.lane.b32.xlu0 %v770, 256
        %v773 = vpop.permute.xlu0 %772
        %s775 = sor.u32 256, 8
        %776 = vbcast.lane.b32.xlu0 %v770, %s775
        %v777 = vpop.permute.xlu0 %776
        %s779 = sor.u32 256, 16
        %780 = vbcast.lane.b32.xlu0 %v770, %s779
        %v781 = vpop.permute.xlu0 %780
        %v782 = vlaneseq
        %v783 = vshrl.u32 %v782, 7
        %v784 = vsub.s32 3, %v783
        %v785 = vrot.slane %v736, %v784
        %787 = vbcast.lane.b32.xlu0 %v785, 256
        %v788 = vpop.permute.xlu0 %787
        %s790 = sor.u32 256, 8
        %791 = vbcast.lane.b32.xlu0 %v785, %s790
        %v792 = vpop.permute.xlu0 %791
        %s794 = sor.u32 256, 16
        %795 = vbcast.lane.b32.xlu0 %v785, %s794
        %v796 = vpop.permute.xlu0 %795
        %v797 = vlaneseq
        %v798 = vshrl.u32 %v797, 7
        %v799 = vsub.s32 4, %v798
        %v800 = vrot.slane %v736, %v799
        %802 = vbcast.lane.b32.xlu0 %v800, 256
        %v803 = vpop.permute.xlu0 %802
        %s805 = sor.u32 256, 8
        %806 = vbcast.lane.b32.xlu0 %v800, %s805
        %v807 = vpop.permute.xlu0 %806
        %s809 = sor.u32 256, 16
        %810 = vbcast.lane.b32.xlu0 %v800, %s809
        %v811 = vpop.permute.xlu0 %810
        %v812 = vlaneseq
        %v813 = vshrl.u32 %v812, 7
        %v814 = vsub.s32 5, %v813
        %v815 = vrot.slane %v736, %v814
        %817 = vbcast.lane.b32.xlu0 %v815, 256
        %v818 = vpop.permute.xlu0 %817
        %s820 = sor.u32 256, 8
        %821 = vbcast.lane.b32.xlu0 %v815, %s820
        %v822 = vpop.permute.xlu0 %821
        %s824 = sor.u32 256, 16
        %825 = vbcast.lane.b32.xlu0 %v815, %s824
        %v826 = vpop.permute.xlu0 %825
        %v827 = vlaneseq
        %v828 = vshrl.u32 %v827, 7
        %v829 = vsub.s32 6, %v828
        %v830 = vrot.slane %v736, %v829
        %832 = vbcast.lane.b32.xlu0 %v830, 256
        %v833 = vpop.permute.xlu0 %832
        %s835 = sor.u32 256, 8
        %836 = vbcast.lane.b32.xlu0 %v830, %s835
        %v837 = vpop.permute.xlu0 %836
        %s839 = sor.u32 256, 16
        %840 = vbcast.lane.b32.xlu0 %v830, %s839
        %v841 = vpop.permute.xlu0 %840
        %v842 = vlaneseq
        %v843 = vshrl.u32 %v842, 7
        %v844 = vsub.s32 7, %v843
        %v845 = vrot.slane %v736, %v844
        %847 = vbcast.lane.b32.xlu0 %v845, 256
        %v848 = vpop.permute.xlu0 %847
        %s850 = sor.u32 256, 8
        %851 = vbcast.lane.b32.xlu0 %v845, %s850
        %v852 = vpop.permute.xlu0 %851
        %s854 = sor.u32 256, 16
        %855 = vbcast.lane.b32.xlu0 %v845, %s854
        %v856 = vpop.permute.xlu0 %855
        %vm857 = vcmp.gt.f32.partialorder %v743, 0.0
        %vm858 = vcmp.gt.f32.partialorder %v747, 0.0
        %vm859 = vcmp.gt.f32.partialorder %v751, 0.0
        %vm860 = vcmp.gt.f32.partialorder %v758, 0.0
        %vm861 = vcmp.gt.f32.partialorder %v762, 0.0
        %vm862 = vcmp.gt.f32.partialorder %v766, 0.0
        %vm863 = vcmp.gt.f32.partialorder %v773, 0.0
        %vm864 = vcmp.gt.f32.partialorder %v777, 0.0
        %vm865 = vcmp.gt.f32.partialorder %v781, 0.0
        %vm866 = vcmp.gt.f32.partialorder %v788, 0.0
        %vm867 = vcmp.gt.f32.partialorder %v792, 0.0
        %vm868 = vcmp.gt.f32.partialorder %v796, 0.0
        %vm869 = vcmp.gt.f32.partialorder %v803, 0.0
        %vm870 = vcmp.gt.f32.partialorder %v807, 0.0
        %vm871 = vcmp.gt.f32.partialorder %v811, 0.0
        %vm872 = vcmp.gt.f32.partialorder %v818, 0.0
        %vm873 = vcmp.gt.f32.partialorder %v822, 0.0
        %vm874 = vcmp.gt.f32.partialorder %v826, 0.0
        %vm875 = vcmp.gt.f32.partialorder %v833, 0.0
        %vm876 = vcmp.gt.f32.partialorder %v837, 0.0
        %vm877 = vcmp.gt.f32.partialorder %v841, 0.0
        %vm878 = vcmp.gt.f32.partialorder %v848, 0.0
        %vm879 = vcmp.gt.f32.partialorder %v852, 0.0
        %vm880 = vcmp.gt.f32.partialorder %v856, 0.0
        %v881 = vsel %vm857, 1, 0
        %v882 = vsel %vm858, 1, 0
        %v883 = vsel %vm859, 1, 0
        %v884 = vsel %vm860, 1, 0
        %v885 = vsel %vm861, 1, 0
        %v886 = vsel %vm862, 1, 0
        %v887 = vsel %vm863, 1, 0
        %v888 = vsel %vm864, 1, 0
        %v889 = vsel %vm865, 1, 0
        %v890 = vsel %vm866, 1, 0
        %v891 = vsel %vm867, 1, 0
        %v892 = vsel %vm868, 1, 0
        %v893 = vsel %vm869, 1, 0
        %v894 = vsel %vm870, 1, 0
        %v895 = vsel %vm871, 1, 0
        %v896 = vsel %vm872, 1, 0
        %v897 = vsel %vm873, 1, 0
        %v898 = vsel %vm874, 1, 0
        %v899 = vsel %vm875, 1, 0
        %v900 = vsel %vm876, 1, 0
        %v901 = vsel %vm877, 1, 0
        %v902 = vsel %vm878, 1, 0
        %v903 = vsel %vm879, 1, 0
        %v904 = vsel %vm880, 1, 0
        %v905 = vcvt.s32.f32 %v881
        %v906 = vcvt.s32.f32 %v882
        %v907 = vcvt.s32.f32 %v883
        %v908 = vcvt.s32.f32 %v884
        %v909 = vcvt.s32.f32 %v885
        %v910 = vcvt.s32.f32 %v886
        %v911 = vcvt.s32.f32 %v887
        %v912 = vcvt.s32.f32 %v888
        %v913 = vcvt.s32.f32 %v889
        %v914 = vcvt.s32.f32 %v890
        %v915 = vcvt.s32.f32 %v891
        %v916 = vcvt.s32.f32 %v892
        %v917 = vcvt.s32.f32 %v893
        %v918 = vcvt.s32.f32 %v894
        %v919 = vcvt.s32.f32 %v895
        %v920 = vcvt.s32.f32 %v896
        %v921 = vcvt.s32.f32 %v897
        %v922 = vcvt.s32.f32 %v898
        %v923 = vcvt.s32.f32 %v899
        %v924 = vcvt.s32.f32 %v900
        %v925 = vcvt.s32.f32 %v901
        %v926 = vcvt.s32.f32 %v902
        %v927 = vcvt.s32.f32 %v903
        %v928 = vcvt.s32.f32 %v904
        %v929 = vsub.f32 %v905, 1.0
        %v930 = vsub.f32 %v906, 1.0
        %v931 = vsub.f32 %v907, 1.0
        %v932 = vsub.f32 %v908, 1.0
        %v933 = vsub.f32 %v909, 1.0
        %v934 = vsub.f32 %v910, 1.0
        %v935 = vsub.f32 %v911, 1.0
        %v936 = vsub.f32 %v912, 1.0
        %v937 = vsub.f32 %v913, 1.0
        %v938 = vsub.f32 %v914, 1.0
        %v939 = vsub.f32 %v915, 1.0
        %v940 = vsub.f32 %v916, 1.0
        %v941 = vsub.f32 %v917, 1.0
        %v942 = vsub.f32 %v918, 1.0
        %v943 = vsub.f32 %v919, 1.0
        %v944 = vsub.f32 %v920, 1.0
        %v945 = vsub.f32 %v921, 1.0
        %v946 = vsub.f32 %v922, 1.0
        %v947 = vsub.f32 %v923, 1.0
        %v948 = vsub.f32 %v924, 1.0
        %v949 = vsub.f32 %v925, 1.0
        %v950 = vsub.f32 %v926, 1.0
        %v951 = vsub.f32 %v927, 1.0
        %v952 = vsub.f32 %v928, 1.0
        %v953 = vmul.f32 %v929, 1e+30
        %v954 = vmul.f32 %v930, 1e+30
        %v955 = vmul.f32 %v931, 1e+30
        %v956 = vmul.f32 %v932, 1e+30
        %v957 = vmul.f32 %v933, 1e+30
        %v958 = vmul.f32 %v934, 1e+30
        %v959 = vmul.f32 %v935, 1e+30
        %v960 = vmul.f32 %v936, 1e+30
        %v961 = vmul.f32 %v937, 1e+30
        %v962 = vmul.f32 %v938, 1e+30
        %v963 = vmul.f32 %v939, 1e+30
        %v964 = vmul.f32 %v940, 1e+30
        %v965 = vmul.f32 %v941, 1e+30
        %v966 = vmul.f32 %v942, 1e+30
        %v967 = vmul.f32 %v943, 1e+30
        %v968 = vmul.f32 %v944, 1e+30
        %v969 = vmul.f32 %v945, 1e+30
        %v970 = vmul.f32 %v946, 1e+30
        %v971 = vmul.f32 %v947, 1e+30
        %v972 = vmul.f32 %v948, 1e+30
        %v973 = vmul.f32 %v949, 1e+30
        %v974 = vmul.f32 %v950, 1e+30
        %v975 = vmul.f32 %v951, 1e+30
        %v976 = vmul.f32 %v952, 1e+30
        %v977 = vadd.f32 %v480, %v953
        %v978 = vadd.f32 %v485, %v954
        %v979 = vadd.f32 %v490, %v955
        %v980 = vadd.f32 %v495, %v956
        %v981 = vadd.f32 %v500, %v957
        %v982 = vadd.f32 %v505, %v958
        %v983 = vadd.f32 %v510, %v959
        %v984 = vadd.f32 %v515, %v960
        %v985 = vadd.f32 %v520, %v961
        %v986 = vadd.f32 %v525, %v962
        %v987 = vadd.f32 %v530, %v963
        %v988 = vadd.f32 %v535, %v964
        %v989 = vadd.f32 %v540, %v965
        %v990 = vadd.f32 %v545, %v966
        %v991 = vadd.f32 %v550, %v967
        %v992 = vadd.f32 %v555, %v968
        %v993 = vadd.f32 %v560, %v969
        %v994 = vadd.f32 %v565, %v970
        %v995 = vadd.f32 %v570, %v971
        %v996 = vadd.f32 %v575, %v972
        %v997 = vadd.f32 %v580, %v973
        %v998 = vadd.f32 %v585, %v974
        %v999 = vadd.f32 %v590, %v975
        %v1000 = vadd.f32 %v595, %v976
        %v1001 = vsel %vm599, %v977, -inf
        %v1002 = vsel %vm599, %v978, -inf
        %v1003 = vmax.f32 %v1001, %v1002
        %v1004 = vsel %vm599, %v979, -inf
        %v1005 = vmax.f32 %v1003, %v1004
        %v1006 = vrot.slane %v1005, 4
        %v1007 = vmax.f32 %v1005, %v1006
        %v1008 = vrot.slane %v1007, 2
        %v1009 = vmax.f32 %v1007, %v1008
        %v1010 = vrot.slane %v1009, 1
        %v1011 = vmax.f32 %v1009, %v1010
        %v1012 = vsel %vm599, %v980, -inf
        %v1013 = vsel %vm599, %v981, -inf
        %v1014 = vmax.f32 %v1012, %v1013
        %v1015 = vsel %vm599, %v982, -inf
        %v1016 = vmax.f32 %v1014, %v1015
        %v1017 = vrot.slane %v1016, 4
        %v1018 = vmax.f32 %v1016, %v1017
        %v1019 = vrot.slane %v1018, 2
        %v1020 = vmax.f32 %v1018, %v1019
        %v1021 = vrot.slane %v1020, 1
        %v1022 = vmax.f32 %v1020, %v1021
        %v1023 = vsel %vm599, %v983, -inf
        %v1024 = vsel %vm599, %v984, -inf
        %v1025 = vmax.f32 %v1023, %v1024
        %v1026 = vsel %vm599, %v985, -inf
        %v1027 = vmax.f32 %v1025, %v1026
        %v1028 = vrot.slane %v1027, 4
        %v1029 = vmax.f32 %v1027, %v1028
        %v1030 = vrot.slane %v1029, 2
        %v1031 = vmax.f32 %v1029, %v1030
        %v1032 = vrot.slane %v1031, 1
        %v1033 = vmax.f32 %v1031, %v1032
        %v1034 = vsel %vm599, %v986, -inf
        %v1035 = vsel %vm599, %v987, -inf
        %v1036 = vmax.f32 %v1034, %v1035
        %v1037 = vsel %vm599, %v988, -inf
        %v1038 = vmax.f32 %v1036, %v1037
        %v1039 = vrot.slane %v1038, 4
        %v1040 = vmax.f32 %v1038, %v1039
        %v1041 = vrot.slane %v1040, 2
        %v1042 = vmax.f32 %v1040, %v1041
        %v1043 = vrot.slane %v1042, 1
        %v1044 = vmax.f32 %v1042, %v1043
        %v1045 = vsel %vm599, %v989, -inf
        %v1046 = vsel %vm599, %v990, -inf
        %v1047 = vmax.f32 %v1045, %v1046
        %v1048 = vsel %vm599, %v991, -inf
        %v1049 = vmax.f32 %v1047, %v1048
        %v1050 = vrot.slane %v1049, 4
        %v1051 = vmax.f32 %v1049, %v1050
        %v1052 = vrot.slane %v1051, 2
        %v1053 = vmax.f32 %v1051, %v1052
        %v1054 = vrot.slane %v1053, 1
        %v1055 = vmax.f32 %v1053, %v1054
        %v1056 = vsel %vm599, %v992, -inf
        %v1057 = vsel %vm599, %v993, -inf
        %v1058 = vmax.f32 %v1056, %v1057
        %v1059 = vsel %vm599, %v994, -inf
        %v1060 = vmax.f32 %v1058, %v1059
        %v1061 = vrot.slane %v1060, 4
        %v1062 = vmax.f32 %v1060, %v1061
        %v1063 = vrot.slane %v1062, 2
        %v1064 = vmax.f32 %v1062, %v1063
        %v1065 = vrot.slane %v1064, 1
        %v1066 = vmax.f32 %v1064, %v1065
        %v1067 = vsel %vm599, %v995, -inf
        %v1068 = vsel %vm599, %v996, -inf
        %v1069 = vmax.f32 %v1067, %v1068
        %v1070 = vsel %vm599, %v997, -inf
        %v1071 = vmax.f32 %v1069, %v1070
        %v1072 = vrot.slane %v1071, 4
        %v1073 = vmax.f32 %v1071, %v1072
        %v1074 = vrot.slane %v1073, 2
        %v1075 = vmax.f32 %v1073, %v1074
        %v1076 = vrot.slane %v1075, 1
        %v1077 = vmax.f32 %v1075, %v1076
        %v1078 = vsel %vm599, %v998, -inf
        %v1079 = vsel %vm599, %v999, -inf
        %v1080 = vmax.f32 %v1078, %v1079
        %v1081 = vsel %vm599, %v1000, -inf
        %v1082 = vmax.f32 %v1080, %v1081
        %v1083 = vrot.slane %v1082, 4
        %v1084 = vmax.f32 %v1082, %v1083
        %v1085 = vrot.slane %v1084, 2
        %v1086 = vmax.f32 %v1084, %v1085
        %v1087 = vrot.slane %v1086, 1
        %v1088 = vmax.f32 %v1086, %v1087
        %vm1097 = vcmask 1041409
        %v1098 = vsel %vm1097, %v1022, %v1011
        %vm1099 = vcmask 1042434
        %v1100 = vsel %vm1099, %v1033, %v1098
        %vm1101 = vcmask 1043459
        %v1102 = vsel %vm1101, %v1044, %v1100
        %vm1103 = vcmask 1044484
        %v1104 = vsel %vm1103, %v1055, %v1102
        %vm1105 = vcmask 1045509
        %v1106 = vsel %vm1105, %v1066, %v1104
        %vm1107 = vcmask 1046534
        %v1108 = vsel %vm1107, %v1077, %v1106
        %vm1109 = vcmask 1047559
        %v1110 = vsel %vm1109, %v1088, %v1108
        %1112 = vst.msk [vmem:[%s283] sm:$0xff] %vm599, %v1110
        %s1113 = sand.u32 %s124, 1
        %s1114 = scalar_lea.sflag [#allocation3], %s1113
        %s1115 = sand.u32 %s124, 1
        %s1116 = scalar_lea.vmem [#allocation2], %s1115
        %s1117 = sand.u32 %s23, 1
        %s1118 = scalar_lea.sflag [#allocation5], %s1117
        %s1119 = sand.u32 %s150, 1
        %s1120 = scalar_lea.vmem [#allocation4], %s1119
        %s1121 = sand.u32 %s23, 1
        %s1122 = scalar_lea.sflag [#allocation5], %s1121
        %s1123 = sand.u32 %s180, 1
        %s1124 = smul.addr %s1123, 8
        %s1125 = scalar_lea.vmem [#allocation6], %s1124
        // Predicated region
        $region37: #{tpu_custom_call.1} parent=31 // pred_check
          %p1126 = pneg %p134
        $region38: #{tpu_custom_call.1} parent=31 // pred_check_branch
          %1128 = sbr.rel (%p1126) target = $region40
        $region39: #{tpu_custom_call.1} parent=31 // pred_region
          %s1130 = ssub.s32 16, 16
          %1131 = vsyncadd %s1114, %s1130
          %s1132 = smul.addr %s27, 16
          %s1133 = scalar_lea.hbm %s3, %s1132
          %s1135 = sshll.u32 %s1116, 4
          %s1136 = int_to_ptr.vmem [resolvable:$true] %s1135
          %1138 = dma.vmem_to_hbm [thread:$0]  %s1136, 16, %s1133, %s1114
        $region40: #{tpu_custom_call.1} parent=31 // pred_fallthru
          _
        // Predicated region
        $region41: #{tpu_custom_call.1} parent=31 // pred_check
          %p1139 = pneg %p160
        $region42: #{tpu_custom_call.1} parent=31 // pred_check_branch
          %1141 = sbr.rel (%p1139) target = $region44
        $region43: #{tpu_custom_call.1} parent=31 // pred_region
          %s1143 = ssub.s32 16, 16
          %1144 = vsyncadd %s1118, %s1143
          %s1145 = smul.addr %s27, 16
          %s1146 = scalar_lea.hbm %s4, %s1145
          %s1148 = sshll.u32 %s1120, 4
          %s1149 = int_to_ptr.vmem [resolvable:$true] %s1148
          %1151 = dma.vmem_to_hbm [thread:$0]  %s1149, 16, %s1146, %s1118
        $region44: #{tpu_custom_call.1} parent=31 // pred_fallthru
          _
        // Predicated region
        $region45: #{tpu_custom_call.1} parent=31 // pred_check
          %p1152 = pneg %p190
        $region46: #{tpu_custom_call.1} parent=31 // pred_check_branch
          %1154 = sbr.rel (%p1152) target = $region48
        $region47: #{tpu_custom_call.1} parent=31 // pred_region
          %s1155 = smul.u32 %s27, 2
          %s1156 = sadd.s32 %s1155, %s28
          %s1158 = ssub.s32 128, 128
          %1159 = vsyncadd %s1122, %s1158
          %s1160 = smul.addr %s1156, 128
          %s1161 = scalar_lea.hbm %s5, %s1160
          %s1163 = sshll.u32 %s1125, 4
          %s1164 = int_to_ptr.vmem [resolvable:$true] %s1163
          %1166 = dma.vmem_to_hbm [thread:$0]  %s1164, 128, %s1161, %s1122
        $region48: #{tpu_custom_call.1} parent=31 // pred_fallthru
          _
      $region32: #{tpu_custom_call.1} parent=5 // pred_fallthru
        _
      %p1167 = scmp.le.s32.totalorder 2, %s18
      // Predicated region
      $region49: #{tpu_custom_call.1} parent=5 // pred_check
        %p1168 = pneg %p1167
      $region50: #{tpu_custom_call.1} parent=5 // pred_check_branch
        %1170 = sbr.rel (%p1168) target = $region52
      $region51: #{tpu_custom_call.1} parent=5 // pred_region
        %s1171 = ssub.s32 %s18, 2
        // Predicated region
        $region53: #{tpu_custom_call.1} parent=51 // pred_check
          %p1172 = pneg %p140
        $region54: #{tpu_custom_call.1} parent=51 // pred_check_branch
          %1174 = sbr.rel (%p1172) target = $region56
        $region55: #{tpu_custom_call.1} parent=51 // pred_region
          %s1175 = sand.u32 %s125, 1
          %s1176 = scalar_lea.sflag [#allocation3], %s1175
          %s1177 = sand.u32 %s125, 1
          %s1178 = scalar_lea.vmem [#allocation2], %s1177
          %1179 = dma.done %s1176, 16
        $region56: #{tpu_custom_call.1} parent=51 // pred_fallthru
          _
        // Predicated region
        $region57: #{tpu_custom_call.1} parent=51 // pred_check
          %p1180 = pneg %p166
        $region58: #{tpu_custom_call.1} parent=51 // pred_check_branch
          %1182 = sbr.rel (%p1180) target = $region60
        $region59: #{tpu_custom_call.1} parent=51 // pred_region
          %s1183 = sand.u32 %s24, 1
          %s1184 = scalar_lea.sflag [#allocation5], %s1183
          %s1185 = sand.u32 %s151, 1
          %s1186 = scalar_lea.vmem [#allocation4], %s1185
          %1187 = dma.done %s1184, 16
        $region60: #{tpu_custom_call.1} parent=51 // pred_fallthru
          _
        // Predicated region
        $region61: #{tpu_custom_call.1} parent=51 // pred_check
          %p1188 = pneg %p196
        $region62: #{tpu_custom_call.1} parent=51 // pred_check_branch
          %1190 = sbr.rel (%p1188) target = $region64
        $region63: #{tpu_custom_call.1} parent=51 // pred_region
          %s1191 = sand.u32 %s24, 1
          %s1192 = scalar_lea.sflag [#allocation5], %s1191
          %s1193 = sand.u32 %s181, 1
          %s1194 = smul.addr %s1193, 8
          %s1195 = scalar_lea.vmem [#allocation6], %s1194
          %1196 = dma.done %s1192, 128
        $region64: #{tpu_custom_call.1} parent=51 // pred_fallthru
          _
      $region52: #{tpu_custom_call.1} parent=5 // pred_fallthru
        _
    $region6: #{tpu_custom_call.1} parent=1 // loop_footer
      %s22 = sadd.s32 1, %s18
    $region7: #{tpu_custom_call.1} parent=1 // loop_footer_branch
      %17 = sbr.rel target = $region3
    $region8: #{tpu_custom_call.1} parent=1 // loop_exit
      _
    %1197 = vsyncpa [#allocation3], 1
    %s1198 = scalar_lea.sflag [#allocation3], 1
    %1199 = vsyncpa %s1198, 1
    %1200 = vsyncpa [#allocation5], 1
    %s1201 = scalar_lea.sflag [#allocation5], 1
    %1202 = vsyncpa %s1201, 1

</llo_original>
